<compile_context>
chip_gen: v5e
topology: v5e:2x2
jax: 0.10.0
libtpu: 0.0.40
codegen_flags: <defaults>
</compile_context>

<pallas_src>
import functools
import math

import jax
import jax.numpy as jnp
import numpy as np
from jax.experimental import pallas as pl
from jax.experimental.pallas import tpu as pltpu


# ----------------------------------------------------------------------------
# Tile-size helpers (keep blocks (8,128)-friendly and evenly dividing).
# ----------------------------------------------------------------------------
def _tile_sub(dim, target):
    """Largest multiple of 8 that divides `dim` and is <= target, else `dim`."""
    if dim <= target:
        return dim
    t = (target // 8) * 8
    while t >= 8:
        if dim % t == 0:
            return t
        t -= 8
    return dim


def _tile_lane(dim, target):
    """Largest multiple of 128 that divides `dim` and is <= target, else `dim`."""
    if dim <= target:
        return dim
    t = (target // 128) * 128
    while t >= 128:
        if dim % t == 0:
            return t
        t -= 128
    return dim


def _default_tq(seq_len):
    """Per-generation query-tile default (perf review): 256 on v6e (128 MiB VMEM),
    128 on v5e, 128 on v7x (64 for very long S on its 64 MiB VMEM)."""
    try:
        kind = jax.devices()[0].device_kind.lower()
    except Exception:  # pragma: no cover - host-side only
        kind = ""
    if "v6" in kind and seq_len <= 4096:
        return 256
    if "7" in kind and seq_len >= 8192:
        return 64
    return 128


# ----------------------------------------------------------------------------
# Kernel 1: tiled dense linear projection  y = x @ W + b   (bf16 ops, f32 accum)
# ----------------------------------------------------------------------------
def linear_kernel(x_ref, w_ref, b_ref, o_ref, acc_ref):
    @pl.when(pl.program_id(2) == 0)
    def _init():
        acc_ref[...] = jnp.zeros_like(acc_ref)

    acc_ref[...] += jnp.dot(x_ref[...], w_ref[...],
                            preferred_element_type=jnp.float32)

    @pl.when(pl.program_id(2) == pl.num_programs(2) - 1)
    def _flush():
        o_ref[...] = (acc_ref[...] + b_ref[...]).astype(o_ref.dtype)


def pallas_linear(x, w, b, *, out_dtype=None, tm=512, tn=1024, tk=512):
    """x: (M, K), w: (K, N), b: (N,) -> (M, N).  Accumulation is f32; operand and
    output dtypes follow x / out_dtype (bf16 on the fast path)."""
    M, K = x.shape
    Kw, N = w.shape
    assert K == Kw
    out_dtype = out_dtype or x.dtype
    # Perf review: tn>=1024 / tm=512 so the activation block isn't re-fetched from
    # HBM N/tn times for the wide fused-QKV output.
    tm = _tile_sub(M, tm)
    tn = _tile_lane(N, tn)
    tk = _tile_lane(K, tk)
    grid = (M // tm, N // tn, K // tk)

    isz = jnp.dtype(x.dtype).itemsize
    osz = jnp.dtype(out_dtype).itemsize
    # Double-buffered input/output blocks + f32 accumulator + margin (v5e's default
    # scoped VMEM is only 16 MiB, so set the limit explicitly).
    need = 2 * (tm * tk * isz + tk * tn * isz + tn * 4 + tm * tn * osz) + tm * tn * 4
    vmem_limit = int(min(64 * 2 ** 20, max(32 * 2 ** 20, need + 8 * 2 ** 20)))

    return pl.pallas_call(
        linear_kernel,
        out_shape=jax.ShapeDtypeStruct((M, N), out_dtype),
        grid=grid,
        in_specs=[
            pl.BlockSpec((tm, tk), lambda i, j, kk: (i, kk)),
            pl.BlockSpec((tk, tn), lambda i, j, kk: (kk, j)),
            pl.BlockSpec((1, tn), lambda i, j, kk: (0, j)),
        ],
        out_specs=pl.BlockSpec((tm, tn), lambda i, j, kk: (i, j)),
        scratch_shapes=[pltpu.VMEM((tm, tn), jnp.float32)],
        compiler_params=pltpu.CompilerParams(
            dimension_semantics=("parallel", "parallel", "arbitrary"),
            vmem_limit_bytes=vmem_limit),
    )(x, w, b.astype(jnp.float32).reshape(1, N))


# ----------------------------------------------------------------------------
# Kernel 2: sparse (top-k) attention for one (batch, head, query-tile) step
# ----------------------------------------------------------------------------
def sparse_attn_kernel(*refs, k_top, scale, has_mask):
    if has_mask:
        q_ref, k_ref, v_ref, m_ref, o_ref = refs
    else:
        q_ref, k_ref, v_ref, o_ref = refs
        m_ref = None

    q = q_ref[0]                              # (tq, D)  compute dtype (bf16/f32)
    k = k_ref[0]                              # (S, D)
    v = v_ref[0]                              # (S, D)
    tq = q.shape[0]
    S = k.shape[0]

    # scores = q @ k^T : contract the D axes directly (transposed-RHS MXU push, no
    # explicit K^T copy); accumulate f32 and apply 1/sqrt(D) to the f32 result so
    # the MXU operands stay in the (bf16) compute dtype.
    s = jax.lax.dot_general(q, k, (((1,), (1,)), ((), ())),
                            preferred_element_type=jnp.float32) * scale   # (tq, S)
    if m_ref is not None:
        s = s + m_ref[0].astype(jnp.float32)  # additive mask, broadcast over rows

    # --- exact per-row k-th largest score.
    # Monotone int32 key of the f32 score (signed order == float order; assumes no NaN).
    u = pltpu.bitcast(s, jnp.int32)
    key = jnp.where(u < 0, u ^ jnp.int32(0x7FFFFFFF), u)

    # Radix select, 2 bits per pass -> 16 serialized passes (was 32).  The three
    # candidate counts of each pass are independent and are computed as bf16
    # (tq,S)x(S,1) matvecs on the MXU (idle during the select) instead of XLU
    # lane-reductions.  All shifts/offsets are static Python constants.
    ones_col = jnp.ones((S, 1), dtype=jnp.bfloat16)
    kf = jnp.float32(k_top)

    def count_ge(cand):                       # cand: (tq, 1) int32
        ind = jnp.where(key >= cand, 1.0, 0.0).astype(jnp.bfloat16)
        return jnp.dot(ind, ones_col, preferred_element_type=jnp.float32)  # (tq, 1)

    def _i32(val):                            # wrap a Python int into int32 range
        val &= 0xFFFFFFFF
        if val >= 2 ** 31:
            val -= 2 ** 32
        return np.int32(val)

    # prefix is the running threshold (signed int32); invariant: count(key>=prefix)>=k.
    prefix = jnp.full((tq, 1), np.int32(-2 ** 31), dtype=jnp.int32)
    for p_i in range(16):                     # fully unrolled (static offsets)
        sh = 30 - 2 * p_i
        off1, off2, off3 = (_i32(1 << sh), _i32(2 << sh), _i32(3 << sh))
        c1 = count_ge(prefix + off1)
        c2 = count_ge(prefix + off2)
        c3 = count_ge(prefix + off3)
        add = jnp.where(c3 >= kf, off3,
              jnp.where(c2 >= kf, off2,
              jnp.where(c1 >= kf, off1, np.int32(0))))
        prefix = prefix + add                 # int32 wraparound add (intended)
    keep = key >= prefix                      # ties kept (== lax.top_k thresholding)

    # --- thresholding fused into the f32 softmax; the global row max is always kept.
    row_max = jnp.max(s, axis=-1, keepdims=True)
    p = jnp.where(keep, jnp.exp(s - row_max), 0.0)
    denom = jnp.sum(p, axis=-1, keepdims=True)
    inv = 1.0 / denom                         # exact reciprocal (approx=True failed tol)
    probs = p * inv

    ctx = jnp.dot(probs.astype(v.dtype), v, preferred_element_type=jnp.float32)
    o_ref[0] = ctx.astype(o_ref.dtype)


def pallas_sparse_attention(qkv, num_heads, sparsity, add_mask=None, *, tq_target=None):
    """qkv: (B, S, 3H) packed [q | k | v] projections (heads packed along H).
    Returns head-merged context (B, S, H) in qkv.dtype — lane-dense, ready for o_proj."""
    B, S, H3 = qkv.shape
    H = H3 // 3
    assert H % num_heads == 0
    D = H // num_heads
    # Per-head blocks slice the hidden axis directly, so head_dim must be lane-aligned.
    # TODO(synk): head_dim not a multiple of 128 needs a (B, NH, S, D) fallback layout.
    assert D % 128 == 0, f"head_dim={D} must be a multiple of 128 for lane-sliced heads"

    k_top = max(1, int((1.0 - sparsity) * S))
    scale = 1.0 / math.sqrt(D)
    if tq_target is None:
        tq_target = _default_tq(S)
    tq = _tile_sub(S, tq_target)
    # Perf note (v7x megacore): B and num_heads are the leading "parallel" axes; keep
    # B*num_heads even (or pad heads) for a balanced 2-TensorCore split.
    grid = (B, num_heads, S // tq)

    q_spec = pl.BlockSpec((1, tq, D), lambda b, h, qi: (b, qi, h))
    k_spec = pl.BlockSpec((1, S, D), lambda b, h, qi: (b, 0, num_heads + h))
    v_spec = pl.BlockSpec((1, S, D), lambda b, h, qi: (b, 0, 2 * num_heads + h))
    out_spec = pl.BlockSpec((1, tq, D), lambda b, h, qi: (b, qi, h))

    in_specs = [q_spec, k_spec, v_spec]
    inputs = [qkv, qkv, qkv]
    if add_mask is not None:                  # (B, 1, S) additive mask (f32)
        in_specs.append(pl.BlockSpec((1, 1, S), lambda b, h, qi: (b, 0, 0)))
        inputs.append(add_mask)

    # VMEM budget computed from the actual blocks (review: don't blanket-request
    # 48 MiB — v7x only has 64 MiB/TC).  K/V + q/out blocks are double-buffered;
    # ~8 live (tq, S) f32/int32 temporaries for scores/keys/masks/probs.
    isz = jnp.dtype(qkv.dtype).itemsize
    need = 2 * isz * (2 * tq * D + 2 * S * D) + 8 * tq * S * 4
    if add_mask is not None:
        need += 2 * S * 4
    vmem_limit = int(min(64 * 2 ** 20, max(24 * 2 ** 20, need + 4 * 2 ** 20)))
    # TODO(synk): for very long S on v7x also single-buffer K/V (pl.Buffered(1)) and
    # drop tq to 64; for v6e, grouping two heads per step would fill the 256x256 MXU.

    kernel = functools.partial(sparse_attn_kernel, k_top=k_top, scale=scale,
                               has_mask=add_mask is not None)
    return pl.pallas_call(
        kernel,
        out_shape=jax.ShapeDtypeStruct((B, S, H), qkv.dtype),
        grid=grid,
        in_specs=in_specs,
        out_specs=out_spec,
        compiler_params=pltpu.CompilerParams(
            dimension_semantics=("parallel", "parallel", "parallel"),
            vmem_limit_bytes=vmem_limit),
    )(*inputs)


# ----------------------------------------------------------------------------
# Full forward (glue in plain JAX: only reshapes / dtype casts — no transposes)
# ----------------------------------------------------------------------------
def sparse_self_attention_forward(hidden_states, params, num_heads, sparsity,
                                  attention_mask=None, compute_dtype=jnp.bfloat16):
    """Matches SparseSelfAttention.forward for attention_mask=None or a (B, S) 1/0
    padding mask.  compute_dtype=bf16 is the fast path (f32 MXU accumulation);
    compute_dtype=float32 reproduces the exact module arithmetic.
    TODO(synk): past_key_value / use_cache KV concat, rotary_emb and
    output_attentions returns are host-side plumbing not wired into the kernels."""
    B, S, H = hidden_states.shape
    x = hidden_states.astype(compute_dtype).reshape(B * S, H)

    # Fused q/k/v projection: activations are read from HBM once.
    qkv = pallas_linear(x, params["wqkv"].astype(compute_dtype),
                        params["bqkv"]).reshape(B, S, 3 * H)

    add_mask = None
    if attention_mask is not None:
        add_mask = ((1.0 - attention_mask.astype(jnp.float32)) * -10000.0).reshape(B, 1, S)

    ctx = pallas_sparse_attention(qkv, num_heads, sparsity, add_mask)   # (B, S, H)

    out = pallas_linear(ctx.reshape(B * S, H), params["wo"].astype(compute_dtype),
                        params["bo"], out_dtype=hidden_states.dtype)
    return out.reshape(B, S, H)


# ----------------------------------------------------------------------------
# Pure-JAX references for sanity checks
# ----------------------------------------------------------------------------
def reference_linear(x, w, b, out_dtype):
    return (jnp.dot(x, w, preferred_element_type=jnp.float32)
            + b.astype(jnp.float32)).astype(out_dtype)


def reference_sparse_attention(qkv, num_heads, sparsity, add_mask=None):
    """Plain-JAX sparse attention over the SAME packed qkv tensor (matched precision)."""
    B, S, H3 = qkv.shape
    H = H3 // 3
    D = H // num_heads
    r = qkv.reshape(B, S, 3, num_heads, D)
    q = r[:, :, 0].transpose(0, 2, 1, 3)
    k = r[:, :, 1].transpose(0, 2, 1, 3)
    v = r[:, :, 2].transpose(0, 2, 1, 3)
    s = jnp.einsum("bhqd,bhkd->bhqk", q, k,
                   preferred_element_type=jnp.float32) / math.sqrt(D)
    if add_mask is not None:
        s = s + add_mask[:, :, None, :]
    k_top = max(1, int((1.0 - sparsity) * S))
    thresh = jax.lax.top_k(s, k_top)[0][..., -1:]
    p = jnp.where(s >= thresh, jnp.exp(s - jnp.max(s, axis=-1, keepdims=True)), 0.0)
    p = p / jnp.sum(p, axis=-1, keepdims=True)
    ctx = jnp.einsum("bhqk,bhkd->bhqd", p.astype(qkv.dtype), v,
                     preferred_element_type=jnp.float32)
    return ctx.transpose(0, 2, 1, 3).reshape(B, S, H).astype(qkv.dtype)


def reference_forward(hidden_states, params, num_heads, sparsity, attention_mask=None):
    """Exact (f32, unfused-weight) replica of the PyTorch module forward."""
    B, S, H = hidden_states.shape
    D = H // num_heads
    flat = hidden_states.reshape(B * S, H)
    q = (flat @ params["wq"] + params["bq"]).reshape(B, S, H)
    k = (flat @ params["wk"] + params["bk"]).reshape(B, S, H)
    v = (flat @ params["wv"] + params["bv"]).reshape(B, S, H)

    def split_heads(t):
        return t.reshape(B, S, num_heads, D).transpose(0, 2, 1, 3)

    qh, kh, vh = split_heads(q), split_heads(k), split_heads(v)
    scores = jnp.einsum("bhqd,bhkd->bhqk", qh, kh) / math.sqrt(D)
    if attention_mask is not None:
        add = ((1.0 - attention_mask.astype(jnp.float32)) * -10000.0)[:, None, None, :]
        scores = scores + add
    k_top = max(1, int((1.0 - sparsity) * S))
    thresh = jax.lax.top_k(scores, k_top)[0][..., -1:]
    sparse = jnp.where(scores >= thresh, scores, -jnp.inf)
    probs = jax.nn.softmax(sparse, axis=-1)
    ctx = jnp.einsum("bhqk,bhkd->bhqd", probs, vh)
    merged = ctx.transpose(0, 2, 1, 3).reshape(B * S, H)
    return (merged @ params["wo"] + params["bo"]).reshape(B, S, H)


if __name__ == "__main__":
    # Small config consistent with the module: head_dim = 128 (as in Qwen2.5).
    B, S = 2, 16
    num_heads, head_dim = 2, 128
    H = num_heads * head_dim          # 256
    sparsity = 0.8                    # k_top = max(1, int(0.2 * 16)) = 3

    key = jax.random.PRNGKey(0)
    keys = jax.random.split(key, 9)
    std = 0.02
    params = {
        "wq": std * jax.random.normal(keys[0], (H, H), jnp.float32),
        "bq": std * jax.random.normal(keys[1], (H,), jnp.float32),
        "wk": std * jax.random.normal(keys[2], (H, H), jnp.float32),
        "bk": std * jax.random.normal(keys[3], (H,), jnp.float32),
        "wv": std * jax.random.normal(keys[4], (H, H), jnp.float32),
        "bv": std * jax.random.normal(keys[5], (H,), jnp.float32),
        "wo": std * jax.random.normal(keys[6], (H, H), jnp.float32),
        "bo": std * jax.random.normal(keys[7], (H,), jnp.float32),
    }
    # Pre-fused QKV weight/bias (stored fused in a real deployment).
    params["wqkv"] = jnp.concatenate([params["wq"], params["wk"], params["wv"]], axis=1)
    params["bqkv"] = jnp.concatenate([params["bq"], params["bk"], params["bv"]])

    hidden_states = jax.random.normal(keys[8], (B, S, H), jnp.float32)

    # ---- Test 1: f32 compute path == exact module semantics (no mask + padding mask).
    out = sparse_self_attention_forward(hidden_states, params, num_heads, sparsity,
                                        compute_dtype=jnp.float32)
    out = jax.block_until_ready(out)
    ref = reference_forward(hidden_states, params, num_heads, sparsity)
    np.testing.assert_allclose(np.asarray(out), np.asarray(ref), rtol=2e-3, atol=2e-4)

    lengths = jnp.array([S, S - 4])
    attn_mask = (jnp.arange(S)[None, :] < lengths[:, None]).astype(jnp.float32)
    out_m = sparse_self_attention_forward(hidden_states, params, num_heads, sparsity,
                                          attention_mask=attn_mask,
                                          compute_dtype=jnp.float32)
    out_m = jax.block_until_ready(out_m)
    ref_m = reference_forward(hidden_states, params, num_heads, sparsity,
                              attention_mask=attn_mask)
    np.testing.assert_allclose(np.asarray(out_m), np.asarray(ref_m), rtol=2e-3, atol=2e-4)

    # ---- Test 2: bf16 fast-path kernels vs matched-precision JAX references.
    x_bf16 = hidden_states.astype(jnp.bfloat16).reshape(B * S, H)
    wqkv_bf16 = params["wqkv"].astype(jnp.bfloat16)
    qkv_k = pallas_linear(x_bf16, wqkv_bf16, params["bqkv"])
    qkv_r = reference_linear(x_bf16, wqkv_bf16, params["bqkv"], jnp.bfloat16)
    np.testing.assert_allclose(np.asarray(qkv_k, dtype=np.float32),
                               np.asarray(qkv_r, dtype=np.float32),
                               rtol=2e-2, atol=2e-3)

    qkv3 = qkv_k.reshape(B, S, 3 * H)
    ctx_k = pallas_sparse_attention(qkv3, num_heads, sparsity)
    ctx_k = jax.block_until_ready(ctx_k)
    ctx_r = reference_sparse_attention(qkv3, num_heads, sparsity)
    np.testing.assert_allclose(np.asarray(ctx_k, dtype=np.float32),
                               np.asarray(ctx_r, dtype=np.float32),
                               rtol=2e-2, atol=3e-3)

    # ---- Exercise the full bf16 fast path end-to-end.
    out_fast = sparse_self_attention_forward(hidden_states, params, num_heads, sparsity)
    jax.block_until_ready(out_fast)

    print("KERNEL_OK")
</pallas_src>

<mosaic_0001>
module attributes {stable_mosaic.version = 11 : i64} {
  func.func @linear_kernel(%arg0: i32, %arg1: i32, %arg2: i32, %arg3: memref<32x256xf32, #tpu.memory_space<vmem>>, %arg4: memref<256x768xf32, #tpu.memory_space<vmem>>, %arg5: memref<1x768xf32, #tpu.memory_space<vmem>>, %arg6: memref<32x768xf32, #tpu.memory_space<vmem>>, %arg7: memref<32x768xf32, #tpu.memory_space<vmem>>) attributes {dimension_semantics = [#tpu.dimension_semantics<parallel>, #tpu.dimension_semantics<parallel>, #tpu.dimension_semantics<arbitrary>], iteration_bounds = array<i64: 1, 1, 1>, scalar_prefetch = 0 : i64, scratch_operands = 1 : i64, tpu.core_type = #tpu.core_type<tc>, window_params = [{transform_indices = @transform_0, window_bounds = array<i64: 32, 256>}, {transform_indices = @transform_1, window_bounds = array<i64: 256, 768>}, {transform_indices = @transform_2, window_bounds = array<i64: 1, 768>}, {transform_indices = @transform_3, window_bounds = array<i64: 32, 768>}]} {
    %c0_i32 = arith.constant 0 : i32
    %0 = arith.cmpi eq, %arg2, %c0_i32 : i32
    %1 = arith.extui %0 : i1 to i32
    %c0_i32_0 = arith.constant 0 : i32
    %2 = arith.cmpi ne, %1, %c0_i32_0 : i32
    scf.if %2 {
      %cst_10 = arith.constant 0.000000e+00 : f32
      %12 = vector.broadcast %cst_10 : f32 to vector<32x768xf32>
      %c0_11 = arith.constant 0 : index
      %c0_12 = arith.constant 0 : index
      %13 = vector.load %arg7[%c0_11, %c0_12] : memref<32x768xf32, #tpu.memory_space<vmem>>, vector<32x768xf32>
      tpu.vector_store %arg7[%c0_11, %c0_12], %12 {strides = array<i32>} : memref<32x768xf32, #tpu.memory_space<vmem>>, vector<32x768xf32>,
    } else {
    }
    %c0 = arith.constant 0 : index
    %c0_1 = arith.constant 0 : index
    %3 = vector.load %arg7[%c0, %c0_1] : memref<32x768xf32, #tpu.memory_space<vmem>>, vector<32x768xf32>
    %c0_2 = arith.constant 0 : index
    %c0_3 = arith.constant 0 : index
    %4 = vector.load %arg3[%c0_2, %c0_3] : memref<32x256xf32, #tpu.memory_space<vmem>>, vector<32x256xf32>
    %c0_4 = arith.constant 0 : index
    %c0_5 = arith.constant 0 : index
    %5 = vector.load %arg4[%c0_4, %c0_5] : memref<256x768xf32, #tpu.memory_space<vmem>>, vector<256x768xf32>
    %cst = arith.constant dense<0.000000e+00> : vector<32x768xf32>
    %6 = tpu.matmul %4, %5, %cst {dimension_numbers = #tpu.dot_dimension_numbers<[1], [0], [0], [1], [0, 0, 1, 1], [], []>} : vector<32x256xf32>, vector<256x768xf32>, vector<32x768xf32> -> vector<32x768xf32>
    %7 = arith.addf %3, %6 : vector<32x768xf32>
    %c0_6 = arith.constant 0 : index
    %c0_7 = arith.constant 0 : index
    %8 = vector.load %arg7[%c0_6, %c0_7] : memref<32x768xf32, #tpu.memory_space<vmem>>, vector<32x768xf32>
    tpu.vector_store %arg7[%c0_6, %c0_7], %7 {strides = array<i32>} : memref<32x768xf32, #tpu.memory_space<vmem>>, vector<32x768xf32>,
    %c0_i32_8 = arith.constant 0 : i32
    %9 = arith.cmpi eq, %arg2, %c0_i32_8 : i32
    %10 = arith.extui %9 : i1 to i32
    %c0_i32_9 = arith.constant 0 : i32
    %11 = arith.cmpi ne, %10, %c0_i32_9 : i32
    scf.if %11 {
      %c0_10 = arith.constant 0 : index
      %c0_11 = arith.constant 0 : index
      %12 = vector.load %arg7[%c0_10, %c0_11] : memref<32x768xf32, #tpu.memory_space<vmem>>, vector<32x768xf32>
      %c0_12 = arith.constant 0 : index
      %c0_13 = arith.constant 0 : index
      %13 = vector.load %arg5[%c0_12, %c0_13] : memref<1x768xf32, #tpu.memory_space<vmem>>, vector<1x768xf32>
      %14 = vector.broadcast %13 : vector<1x768xf32> to vector<32x768xf32>
      %15 = arith.addf %12, %14 : vector<32x768xf32>
      %c0_14 = arith.constant 0 : index
      %c0_15 = arith.constant 0 : index
      %16 = vector.load %arg6[%c0_14, %c0_15] : memref<32x768xf32, #tpu.memory_space<vmem>>, vector<32x768xf32>
      tpu.vector_store %arg6[%c0_14, %c0_15], %15 {strides = array<i32>} : memref<32x768xf32, #tpu.memory_space<vmem>>, vector<32x768xf32>,
    } else {
    }
    return
  }
  func.func @transform_0(%arg0: i32, %arg1: i32, %arg2: i32) -> (i32, i32) {
    %c0_i32 = arith.constant 0 : i32
    return %arg0, %arg2 : i32, i32
  }
  func.func @transform_1(%arg0: i32, %arg1: i32, %arg2: i32) -> (i32, i32) {
    %c0_i32 = arith.constant 0 : i32
    return %arg2, %arg1 : i32, i32
  }
  func.func @transform_2(%arg0: i32, %arg1: i32, %arg2: i32) -> (i32, i32) {
    %c0_i32 = arith.constant 0 : i32
    %c0_i32_0 = arith.constant 0 : i32
    return %c0_i32, %arg1 : i32, i32
  }
  func.func @transform_3(%arg0: i32, %arg1: i32, %arg2: i32) -> (i32, i32) {
    %c0_i32 = arith.constant 0 : i32
    return %arg0, %arg1 : i32, i32
  }
}

</mosaic_0001>

<llo_original>
// kernel: tpu_custom_call.1
$region0: #{tpu_custom_call.1}
  #allocation0 [shape = 'u32[]', space=smem, size = 0x4, offset = 0x4, fixed_abs, tag = 'smem constant byte address 0x4 - core index']
  #allocation1 [shape = 'u32[72,128]{1,0:T(1,128)}', space=vmem, size = 0x9000, scoped, tag = 'internal scratch']
  #allocation2 [shape = 'f32[32,768]{1,0:T(8,128)}', space=vmem, size = 0x18000, scoped, tag = 'scratch operand']
  %s0 = inlined_call_operand.hbm [shape: f32[32,256], index: 0, kind: input, shape index: {}]
  %s1 = inlined_call_operand.hbm [shape: f32[256,768], index: 1, kind: input, shape index: {}]
  %s2 = inlined_call_operand.hbm [shape: f32[1,768], index: 2, kind: input, shape index: {}]
  %s3 = inlined_call_operand.hbm [shape: f32[32,768], index: 3, kind: output, shape index: {}]
  %s4 = sld [smem:[#allocation0]]
  $region42: #{tpu_custom_call.1} parent=0
    _
  %s6 = ssub.s32 1, %s4
  %s7 = scalar_select 0, %s6, %s4
  $region1: #{tpu_custom_call.1} parent=0
    #allocation3 [shape = 'u8[32768]{0}', space=vmem, size = 0x8000, scoped, tag = 'input window, operand 0, single buffered']
    #allocation4 [shape = 's32[1]{0}', space=sflag, size = 0x4, scoped, tag = 'scoped memory for tpu_custom_call.1']
    #allocation5 [shape = 's32[1]{0}', space=sflag, size = 0x4, scoped, tag = 'scoped memory for tpu_custom_call.1']
    #allocation6 [shape = 'u8[786432]{0}', space=vmem, size = 0xc0000, scoped, tag = 'input window, operand 1, single buffered']
    #allocation7 [shape = 's32[1]{0}', space=sflag, size = 0x4, scoped, tag = 'scoped memory for tpu_custom_call.1']
    #allocation8 [shape = 'u8[3072]{0}', space=vmem, size = 0xc00, scoped, tag = 'input window, operand 2, single buffered']
    #allocation9 [shape = 'u8[98304]{0}', space=vmem, size = 0x18000, scoped, tag = 'output window, operand 0, single buffered']
    %8 = vsyncpa [#allocation4], 0
    %9 = vsyncpa [#allocation7], 0
    %10 = vsyncpa [#allocation5], 0
    // Predicated region
    $region2: #{tpu_custom_call.1} parent=1 // pred_check
      _
    $region3: #{tpu_custom_call.1} parent=1 // pred_check_branch
      %12 = sbr.rel (0) target = $region5
    $region4: #{tpu_custom_call.1} parent=1 // pred_region
      %14 = vsyncadd [#allocation4], 0
      %s15 = sshll.u32 %s0, 4
      %s16 = int_to_ptr.hbm [resolvable:$true] %s15
      %s17 = sshll.u32 [#allocation3], 4
      %s18 = int_to_ptr.vmem [resolvable:$true] %s17
      %23 = dma.hbm_to_vmem [thread:$0]  %s16, 1024, %s18, [#allocation4], 256, 256, 16
    $region5: #{tpu_custom_call.1} parent=1 // pred_fallthru
      _
    // Predicated region
    $region6: #{tpu_custom_call.1} parent=1 // pred_check
      _
    $region7: #{tpu_custom_call.1} parent=1 // pred_check_branch
      %25 = sbr.rel (0) target = $region9
    $region8: #{tpu_custom_call.1} parent=1 // pred_region
      %27 = vsyncadd [#allocation7], 0
      %s28 = sshll.u32 %s1, 4
      %s29 = int_to_ptr.hbm [resolvable:$true] %s28
      %s30 = sshll.u32 [#allocation6], 4
      %s31 = int_to_ptr.vmem [resolvable:$true] %s30
      %36 = dma.hbm_to_vmem [thread:$0]  %s29, 24576, %s31, [#allocation7], 768, 768, 48
    $region9: #{tpu_custom_call.1} parent=1 // pred_fallthru
      _
    // Predicated region
    $region10: #{tpu_custom_call.1} parent=1 // pred_check
      _
    $region11: #{tpu_custom_call.1} parent=1 // pred_check_branch
      %38 = sbr.rel (0) target = $region13
    $region12: #{tpu_custom_call.1} parent=1 // pred_region
      %40 = vsyncadd [#allocation7], 0
      %s42 = sshll.u32 %s2, 4
      %s43 = int_to_ptr.hbm [resolvable:$true] %s42
      %s44 = sshll.u32 [#allocation8], 4
      %s45 = int_to_ptr.vmem [resolvable:$true] %s44
      %47 = dma.hbm_to_vmem [thread:$0]  %s43, 96, %s45, [#allocation7]
    $region13: #{tpu_custom_call.1} parent=1 // pred_fallthru
      _
    // Predicated region
    $region14: #{tpu_custom_call.1} parent=1 // pred_check
      _
    $region15: #{tpu_custom_call.1} parent=1 // pred_check_branch
      %49 = sbr.rel (0) target = $region17
    $region16: #{tpu_custom_call.1} parent=1 // pred_region
      %51 = dma.done [#allocation4], 1024
    $region17: #{tpu_custom_call.1} parent=1 // pred_fallthru
      _
    // Predicated region
    $region18: #{tpu_custom_call.1} parent=1 // pred_check
      _
    $region19: #{tpu_custom_call.1} parent=1 // pred_check_branch
      %53 = sbr.rel (0) target = $region21
    $region20: #{tpu_custom_call.1} parent=1 // pred_region
      %55 = dma.done [#allocation7], 24576
    $region21: #{tpu_custom_call.1} parent=1 // pred_fallthru
      _
    // Predicated region
    $region22: #{tpu_custom_call.1} parent=1 // pred_check
      _
    $region23: #{tpu_custom_call.1} parent=1 // pred_check_branch
      %57 = sbr.rel (0) target = $region25
    $region24: #{tpu_custom_call.1} parent=1 // pred_region
      %59 = dma.done [#allocation7], 96
    $region25: #{tpu_custom_call.1} parent=1 // pred_fallthru
      _
    %p60 = scmp.eq.s32.totalorder 0, 0
    // Predicated region
    $region26: #{tpu_custom_call.1} parent=1 // pred_check
      %p61 = pneg %p60
    $region27: #{tpu_custom_call.1} parent=1 // pred_check_branch
      %63 = sbr.rel (%p61) target = $region29
    $region28: #{tpu_custom_call.1} parent=1 // pred_region
      %64 = vst [vmem:[#allocation2] sm:$0xff] 0.0
      %65 = vst [vmem:[#allocation2 + $0x8] sm:$0xff] 0.0
      %66 = vst [vmem:[#allocation2 + $0x10] sm:$0xff] 0.0
      %67 = vst [vmem:[#allocation2 + $0x18] sm:$0xff] 0.0
      %68 = vst [vmem:[#allocation2 + $0x20] sm:$0xff] 0.0
      %69 = vst [vmem:[#allocation2 + $0x28] sm:$0xff] 0.0
      %70 = vst [vmem:[#allocation2 + $0x30] sm:$0xff] 0.0
      %71 = vst [vmem:[#allocation2 + $0x38] sm:$0xff] 0.0
      %72 = vst [vmem:[#allocation2 + $0x40] sm:$0xff] 0.0
      %73 = vst [vmem:[#allocation2 + $0x48] sm:$0xff] 0.0
      %74 = vst [vmem:[#allocation2 + $0x50] sm:$0xff] 0.0
      %75 = vst [vmem:[#allocation2 + $0x58] sm:$0xff] 0.0
      %76 = vst [vmem:[#allocation2 + $0x60] sm:$0xff] 0.0
      %77 = vst [vmem:[#allocation2 + $0x68] sm:$0xff] 0.0
      %78 = vst [vmem:[#allocation2 + $0x70] sm:$0xff] 0.0
      %79 = vst [vmem:[#allocation2 + $0x78] sm:$0xff] 0.0
      %80 = vst [vmem:[#allocation2 + $0x80] sm:$0xff] 0.0
      %81 = vst [vmem:[#allocation2 + $0x88] sm:$0xff] 0.0
      %82 = vst [vmem:[#allocation2 + $0x90] sm:$0xff] 0.0
      %83 = vst [vmem:[#allocation2 + $0x98] sm:$0xff] 0.0
      %84 = vst [vmem:[#allocation2 + $0xa0] sm:$0xff] 0.0
      %85 = vst [vmem:[#allocation2 + $0xa8] sm:$0xff] 0.0
      %86 = vst [vmem:[#allocation2 + $0xb0] sm:$0xff] 0.0
      %87 = vst [vmem:[#allocation2 + $0xb8] sm:$0xff] 0.0
    $region29: #{tpu_custom_call.1} parent=1 // pred_fallthru
      _
    %v88 = vld [vmem:[#allocation2] sm:$0xff]
    %v89 = vld [vmem:[#allocation2 + $0x8] sm:$0xff]
    %v90 = vld [vmem:[#allocation2 + $0x10] sm:$0xff]
    %v91 = vld [vmem:[#allocation2 + $0x18] sm:$0xff]
    %v92 = vld [vmem:[#allocation2 + $0x20] sm:$0xff]
    %v93 = vld [vmem:[#allocation2 + $0x28] sm:$0xff]
    %v94 = vld [vmem:[#allocation2 + $0x30] sm:$0xff]
    %v95 = vld [vmem:[#allocation2 + $0x38] sm:$0xff]
    %v96 = vld [vmem:[#allocation2 + $0x40] sm:$0xff]
    %v97 = vld [vmem:[#allocation2 + $0x48] sm:$0xff]
    %v98 = vld [vmem:[#allocation2 + $0x50] sm:$0xff]
    %v99 = vld [vmem:[#allocation2 + $0x58] sm:$0xff]
    %v100 = vld [vmem:[#allocation2 + $0x60] sm:$0xff]
    %v101 = vld [vmem:[#allocation2 + $0x68] sm:$0xff]
    %v102 = vld [vmem:[#allocation2 + $0x70] sm:$0xff]
    %v103 = vld [vmem:[#allocation2 + $0x78] sm:$0xff]
    %v104 = vld [vmem:[#allocation2 + $0x80] sm:$0xff]
    %v105 = vld [vmem:[#allocation2 + $0x88] sm:$0xff]
    %v106 = vld [vmem:[#allocation2 + $0x90] sm:$0xff]
    %v107 = vld [vmem:[#allocation2 + $0x98] sm:$0xff]
    %v108 = vld [vmem:[#allocation2 + $0xa0] sm:$0xff]
    %v109 = vld [vmem:[#allocation2 + $0xa8] sm:$0xff]
    %v110 = vld [vmem:[#allocation2 + $0xb0] sm:$0xff]
    %v111 = vld [vmem:[#allocation2 + $0xb8] sm:$0xff]
    %v112 = vld [vmem:[#allocation3] sm:$0xff]
    %v113 = vld [vmem:[#allocation3 + $0x8] sm:$0xff]
    %v114 = vld [vmem:[#allocation3 + $0x10] sm:$0xff]
    %v115 = vld [vmem:[#allocation3 + $0x18] sm:$0xff]
    %v116 = vld [vmem:[#allocation3 + $0x20] sm:$0xff]
    %v117 = vld [vmem:[#allocation3 + $0x28] sm:$0xff]
    %v118 = vld [vmem:[#allocation3 + $0x30] sm:$0xff]
    %v119 = vld [vmem:[#allocation3 + $0x38] sm:$0xff]
    %v120 = vld [vmem:[#allocation6] sm:$0xff]
    %v121 = vld [vmem:[#allocation6 + $0x8] sm:$0xff]
    %v122 = vld [vmem:[#allocation6 + $0x10] sm:$0xff]
    %v123 = vld [vmem:[#allocation6 + $0x18] sm:$0xff]
    %v124 = vld [vmem:[#allocation6 + $0x20] sm:$0xff]
    %v125 = vld [vmem:[#allocation6 + $0x28] sm:$0xff]
    %v126 = vld [vmem:[#allocation6 + $0x30] sm:$0xff]
    %v127 = vld [vmem:[#allocation6 + $0x38] sm:$0xff]
    %v128 = vld [vmem:[#allocation6 + $0x40] sm:$0xff]
    %v129 = vld [vmem:[#allocation6 + $0x48] sm:$0xff]
    %v130 = vld [vmem:[#allocation6 + $0x50] sm:$0xff]
    %v131 = vld [vmem:[#allocation6 + $0x58] sm:$0xff]
    %v132 = vld [vmem:[#allocation6 + $0x60] sm:$0xff]
    %v133 = vld [vmem:[#allocation6 + $0x68] sm:$0xff]
    %v134 = vld [vmem:[#allocation6 + $0x70] sm:$0xff]
    %v135 = vld [vmem:[#allocation6 + $0x78] sm:$0xff]
    %v136 = vld [vmem:[#allocation6 + $0x80] sm:$0xff]
    %v137 = vld [vmem:[#allocation6 + $0x88] sm:$0xff]
    %v138 = vld [vmem:[#allocation6 + $0x90] sm:$0xff]
    %v139 = vld [vmem:[#allocation6 + $0x98] sm:$0xff]
    %v140 = vld [vmem:[#allocation6 + $0xa0] sm:$0xff]
    %v141 = vld [vmem:[#allocation6 + $0xa8] sm:$0xff]
    %v142 = vld [vmem:[#allocation6 + $0xb0] sm:$0xff]
    %v143 = vld [vmem:[#allocation6 + $0xb8] sm:$0xff]
    %v144 = vld [vmem:[#allocation6 + $0xc0] sm:$0xff]
    %v145 = vld [vmem:[#allocation6 + $0xc8] sm:$0xff]
    %v146 = vld [vmem:[#allocation6 + $0xd0] sm:$0xff]
    %v147 = vld [vmem:[#allocation6 + $0xd8] sm:$0xff]
    %v148 = vld [vmem:[#allocation6 + $0xe0] sm:$0xff]
    %v149 = vld [vmem:[#allocation6 + $0xe8] sm:$0xff]
    %v150 = vld [vmem:[#allocation6 + $0xf0] sm:$0xff]
    %v151 = vld [vmem:[#allocation6 + $0xf8] sm:$0xff]
    %v152 = vld [vmem:[#allocation6 + $0x100] sm:$0xff]
    %v153 = vld [vmem:[#allocation6 + $0x108] sm:$0xff]
    %v154 = vld [vmem:[#allocation6 + $0x110] sm:$0xff]
    %v155 = vld [vmem:[#allocation6 + $0x118] sm:$0xff]
    %v156 = vld [vmem:[#allocation6 + $0x120] sm:$0xff]
    %v157 = vld [vmem:[#allocation6 + $0x128] sm:$0xff]
    %v158 = vld [vmem:[#allocation6 + $0x130] sm:$0xff]
    %v159 = vld [vmem:[#allocation6 + $0x138] sm:$0xff]
    %v160 = vld [vmem:[#allocation6 + $0x140] sm:$0xff]
    %v161 = vld [vmem:[#allocation6 + $0x148] sm:$0xff]
    %v162 = vld [vmem:[#allocation6 + $0x150] sm:$0xff]
    %v163 = vld [vmem:[#allocation6 + $0x158] sm:$0xff]
    %v164 = vld [vmem:[#allocation6 + $0x160] sm:$0xff]
    %v165 = vld [vmem:[#allocation6 + $0x168] sm:$0xff]
    %v166 = vld [vmem:[#allocation6 + $0x170] sm:$0xff]
    %v167 = vld [vmem:[#allocation6 + $0x178] sm:$0xff]
    %v168 = vld [vmem:[#allocation6 + $0x180] sm:$0xff]
    %v169 = vld [vmem:[#allocation6 + $0x188] sm:$0xff]
    %v170 = vld [vmem:[#allocation6 + $0x190] sm:$0xff]
    %v171 = vld [vmem:[#allocation6 + $0x198] sm:$0xff]
    %v172 = vld [vmem:[#allocation6 + $0x1a0] sm:$0xff]
    %v173 = vld [vmem:[#allocation6 + $0x1a8] sm:$0xff]
    %v174 = vld [vmem:[#allocation6 + $0x1b0] sm:$0xff]
    %v175 = vld [vmem:[#allocation6 + $0x1b8] sm:$0xff]
    %v176 = vld [vmem:[#allocation6 + $0x1c0] sm:$0xff]
    %v177 = vld [vmem:[#allocation6 + $0x1c8] sm:$0xff]
    %v178 = vld [vmem:[#allocation6 + $0x1d0] sm:$0xff]
    %v179 = vld [vmem:[#allocation6 + $0x1d8] sm:$0xff]
    %v180 = vld [vmem:[#allocation6 + $0x1e0] sm:$0xff]
    %v181 = vld [vmem:[#allocation6 + $0x1e8] sm:$0xff]
    %v182 = vld [vmem:[#allocation6 + $0x1f0] sm:$0xff]
    %v183 = vld [vmem:[#allocation6 + $0x1f8] sm:$0xff]
    %v184 = vld [vmem:[#allocation6 + $0x200] sm:$0xff]
    %v185 = vld [vmem:[#allocation6 + $0x208] sm:$0xff]
    %v186 = vld [vmem:[#allocation6 + $0x210] sm:$0xff]
    %v187 = vld [vmem:[#allocation6 + $0x218] sm:$0xff]
    %v188 = vld [vmem:[#allocation6 + $0x220] sm:$0xff]
    %v189 = vld [vmem:[#allocation6 + $0x228] sm:$0xff]
    %v190 = vld [vmem:[#allocation6 + $0x230] sm:$0xff]
    %v191 = vld [vmem:[#allocation6 + $0x238] sm:$0xff]
    %v192 = vld [vmem:[#allocation6 + $0x240] sm:$0xff]
    %v193 = vld [vmem:[#allocation6 + $0x248] sm:$0xff]
    %v194 = vld [vmem:[#allocation6 + $0x250] sm:$0xff]
    %v195 = vld [vmem:[#allocation6 + $0x258] sm:$0xff]
    %v196 = vld [vmem:[#allocation6 + $0x260] sm:$0xff]
    %v197 = vld [vmem:[#allocation6 + $0x268] sm:$0xff]
    %v198 = vld [vmem:[#allocation6 + $0x270] sm:$0xff]
    %v199 = vld [vmem:[#allocation6 + $0x278] sm:$0xff]
    %v200 = vld [vmem:[#allocation6 + $0x280] sm:$0xff]
    %v201 = vld [vmem:[#allocation6 + $0x288] sm:$0xff]
    %v202 = vld [vmem:[#allocation6 + $0x290] sm:$0xff]
    %v203 = vld [vmem:[#allocation6 + $0x298] sm:$0xff]
    %v204 = vld [vmem:[#allocation6 + $0x2a0] sm:$0xff]
    %v205 = vld [vmem:[#allocation6 + $0x2a8] sm:$0xff]
    %v206 = vld [vmem:[#allocation6 + $0x2b0] sm:$0xff]
    %v207 = vld [vmem:[#allocation6 + $0x2b8] sm:$0xff]
    %v208 = vld [vmem:[#allocation6 + $0x2c0] sm:$0xff]
    %v209 = vld [vmem:[#allocation6 + $0x2c8] sm:$0xff]
    %v210 = vld [vmem:[#allocation6 + $0x2d0] sm:$0xff]
    %v211 = vld [vmem:[#allocation6 + $0x2d8] sm:$0xff]
    %v212 = vld [vmem:[#allocation6 + $0x2e0] sm:$0xff]
    %v213 = vld [vmem:[#allocation6 + $0x2e8] sm:$0xff]
    %v214 = vld [vmem:[#allocation6 + $0x2f0] sm:$0xff]
    %v215 = vld [vmem:[#allocation6 + $0x2f8] sm:$0xff]
    %v216 = vld [vmem:[#allocation6 + $0x300] sm:$0xff]
    %v217 = vld [vmem:[#allocation6 + $0x308] sm:$0xff]
    %v218 = vld [vmem:[#allocation6 + $0x310] sm:$0xff]
    %v219 = vld [vmem:[#allocation6 + $0x318] sm:$0xff]
    %v220 = vld [vmem:[#allocation6 + $0x320] sm:$0xff]
    %v221 = vld [vmem:[#allocation6 + $0x328] sm:$0xff]
    %v222 = vld [vmem:[#allocation6 + $0x330] sm:$0xff]
    %v223 = vld [vmem:[#allocation6 + $0x338] sm:$0xff]
    %v224 = vld [vmem:[#allocation6 + $0x340] sm:$0xff]
    %v225 = vld [vmem:[#allocation6 + $0x348] sm:$0xff]
    %v226 = vld [vmem:[#allocation6 + $0x350] sm:$0xff]
    %v227 = vld [vmem:[#allocation6 + $0x358] sm:$0xff]
    %v228 = vld [vmem:[#allocation6 + $0x360] sm:$0xff]
    %v229 = vld [vmem:[#allocation6 + $0x368] sm:$0xff]
    %v230 = vld [vmem:[#allocation6 + $0x370] sm:$0xff]
    %v231 = vld [vmem:[#allocation6 + $0x378] sm:$0xff]
    %v232 = vld [vmem:[#allocation6 + $0x380] sm:$0xff]
    %v233 = vld [vmem:[#allocation6 + $0x388] sm:$0xff]
    %v234 = vld [vmem:[#allocation6 + $0x390] sm:$0xff]
    %v235 = vld [vmem:[#allocation6 + $0x398] sm:$0xff]
    %v236 = vld [vmem:[#allocation6 + $0x3a0] sm:$0xff]
    %v237 = vld [vmem:[#allocation6 + $0x3a8] sm:$0xff]
    %v238 = vld [vmem:[#allocation6 + $0x3b0] sm:$0xff]
    %v239 = vld [vmem:[#allocation6 + $0x3b8] sm:$0xff]
    %v240 = vld [vmem:[#allocation6 + $0x3c0] sm:$0xff]
    %v241 = vld [vmem:[#allocation6 + $0x3c8] sm:$0xff]
    %v242 = vld [vmem:[#allocation6 + $0x3d0] sm:$0xff]
    %v243 = vld [vmem:[#allocation6 + $0x3d8] sm:$0xff]
    %v244 = vld [vmem:[#allocation6 + $0x3e0] sm:$0xff]
    %v245 = vld [vmem:[#allocation6 + $0x3e8] sm:$0xff]
    %v246 = vld [vmem:[#allocation6 + $0x3f0] sm:$0xff]
    %v247 = vld [vmem:[#allocation6 + $0x3f8] sm:$0xff]
    %v248 = vld [vmem:[#allocation6 + $0x400] sm:$0xff]
    %v249 = vld [vmem:[#allocation6 + $0x408] sm:$0xff]
    %v250 = vld [vmem:[#allocation6 + $0x410] sm:$0xff]
    %v251 = vld [vmem:[#allocation6 + $0x418] sm:$0xff]
    %v252 = vld [vmem:[#allocation6 + $0x420] sm:$0xff]
    %v253 = vld [vmem:[#allocation6 + $0x428] sm:$0xff]
    %v254 = vld [vmem:[#allocation6 + $0x430] sm:$0xff]
    %v255 = vld [vmem:[#allocation6 + $0x438] sm:$0xff]
    %v256 = vld [vmem:[#allocation6 + $0x440] sm:$0xff]
    %v257 = vld [vmem:[#allocation6 + $0x448] sm:$0xff]
    %v258 = vld [vmem:[#allocation6 + $0x450] sm:$0xff]
    %v259 = vld [vmem:[#allocation6 + $0x458] sm:$0xff]
    %v260 = vld [vmem:[#allocation6 + $0x460] sm:$0xff]
    %v261 = vld [vmem:[#allocation6 + $0x468] sm:$0xff]
    %v262 = vld [vmem:[#allocation6 + $0x470] sm:$0xff]
    %v263 = vld [vmem:[#allocation6 + $0x478] sm:$0xff]
    %v264 = vld [vmem:[#allocation6 + $0x480] sm:$0xff]
    %v265 = vld [vmem:[#allocation6 + $0x488] sm:$0xff]
    %v266 = vld [vmem:[#allocation6 + $0x490] sm:$0xff]
    %v267 = vld [vmem:[#allocation6 + $0x498] sm:$0xff]
    %v268 = vld [vmem:[#allocation6 + $0x4a0] sm:$0xff]
    %v269 = vld [vmem:[#allocation6 + $0x4a8] sm:$0xff]
    %v270 = vld [vmem:[#allocation6 + $0x4b0] sm:$0xff]
    %v271 = vld [vmem:[#allocation6 + $0x4b8] sm:$0xff]
    %v272 = vld [vmem:[#allocation6 + $0x4c0] sm:$0xff]
    %v273 = vld [vmem:[#allocation6 + $0x4c8] sm:$0xff]
    %v274 = vld [vmem:[#allocation6 + $0x4d0] sm:$0xff]
    %v275 = vld [vmem:[#allocation6 + $0x4d8] sm:$0xff]
    %v276 = vld [vmem:[#allocation6 + $0x4e0] sm:$0xff]
    %v277 = vld [vmem:[#allocation6 + $0x4e8] sm:$0xff]
    %v278 = vld [vmem:[#allocation6 + $0x4f0] sm:$0xff]
    %v279 = vld [vmem:[#allocation6 + $0x4f8] sm:$0xff]
    %v280 = vld [vmem:[#allocation6 + $0x500] sm:$0xff]
    %v281 = vld [vmem:[#allocation6 + $0x508] sm:$0xff]
    %v282 = vld [vmem:[#allocation6 + $0x510] sm:$0xff]
    %v283 = vld [vmem:[#allocation6 + $0x518] sm:$0xff]
    %v284 = vld [vmem:[#allocation6 + $0x520] sm:$0xff]
    %v285 = vld [vmem:[#allocation6 + $0x528] sm:$0xff]
    %v286 = vld [vmem:[#allocation6 + $0x530] sm:$0xff]
    %v287 = vld [vmem:[#allocation6 + $0x538] sm:$0xff]
    %v288 = vld [vmem:[#allocation6 + $0x540] sm:$0xff]
    %v289 = vld [vmem:[#allocation6 + $0x548] sm:$0xff]
    %v290 = vld [vmem:[#allocation6 + $0x550] sm:$0xff]
    %v291 = vld [vmem:[#allocation6 + $0x558] sm:$0xff]
    %v292 = vld [vmem:[#allocation6 + $0x560] sm:$0xff]
    %v293 = vld [vmem:[#allocation6 + $0x568] sm:$0xff]
    %v294 = vld [vmem:[#allocation6 + $0x570] sm:$0xff]
    %v295 = vld [vmem:[#allocation6 + $0x578] sm:$0xff]
    %v296 = vld [vmem:[#allocation6 + $0x580] sm:$0xff]
    %v297 = vld [vmem:[#allocation6 + $0x588] sm:$0xff]
    %v298 = vld [vmem:[#allocation6 + $0x590] sm:$0xff]
    %v299 = vld [vmem:[#allocation6 + $0x598] sm:$0xff]
    %v300 = vld [vmem:[#allocation6 + $0x5a0] sm:$0xff]
    %v301 = vld [vmem:[#allocation6 + $0x5a8] sm:$0xff]
    %v302 = vld [vmem:[#allocation6 + $0x5b0] sm:$0xff]
    %v303 = vld [vmem:[#allocation6 + $0x5b8] sm:$0xff]
    %v304 = vld [vmem:[#allocation6 + $0x5c0] sm:$0xff]
    %v305 = vld [vmem:[#allocation6 + $0x5c8] sm:$0xff]
    %v306 = vld [vmem:[#allocation6 + $0x5d0] sm:$0xff]
    %v307 = vld [vmem:[#allocation6 + $0x5d8] sm:$0xff]
    %v308 = vld [vmem:[#allocation6 + $0x5e0] sm:$0xff]
    %v309 = vld [vmem:[#allocation6 + $0x5e8] sm:$0xff]
    %v310 = vld [vmem:[#allocation6 + $0x5f0] sm:$0xff]
    %v311 = vld [vmem:[#allocation6 + $0x5f8] sm:$0xff]
    %312 = vmatpush.msra.mxu0 %v210
    %313 = vmatpush.msra.mxu0 %v204
    %314 = vmatpush.msra.mxu0 %v198
    %315 = vmatpush.msra.mxu0 %v192
    %316 = vmatpush.msra.mxu0 %v186
    %317 = vmatpush.msra.mxu0 %v180
    %318 = vmatpush.msra.mxu0 %v174
    %319 = vmatpush.msra.mxu0 %v168
    %320 = vmatpush.msra.mxu0 %v162
    %321 = vmatpush.msra.mxu0 %v156
    %322 = vmatpush.msra.mxu0 %v150
    %323 = vmatpush.msra.mxu0 %v144
    %324 = vmatpush.msra.mxu0 %v138
    %325 = vmatpush.msra.mxu0 %v132
    %326 = vmatpush.msra.mxu0 %v126
    %327 = vmatpush.msra.mxu0 %v120
    %328 = vmatmul.f32.gmra.mxu0 %v112
    %v329 = vpop.f32.mrf.mxu0
    %v330 = vadd.f32 0.0, %v329
    %331 = vmatmul.f32.gmra.mxu0 %v114
    %v332 = vpop.f32.mrf.mxu0
    %v333 = vadd.f32 0.0, %v332
    %334 = vmatmul.f32.gmra.mxu0 %v116
    %v335 = vpop.f32.mrf.mxu0
    %v336 = vadd.f32 0.0, %v335
    %337 = vmatmul.f32.gmra.mxu0 %v118
    %v338 = vpop.f32.mrf.mxu0
    %v339 = vadd.f32 0.0, %v338
    %340 = vdwg.mxu0
    %341 = vmatpush.msra.mxu0 %v306
    %342 = vmatpush.msra.mxu0 %v300
    %343 = vmatpush.msra.mxu0 %v294
    %344 = vmatpush.msra.mxu0 %v288
    %345 = vmatpush.msra.mxu0 %v282
    %346 = vmatpush.msra.mxu0 %v276
    %347 = vmatpush.msra.mxu0 %v270
    %348 = vmatpush.msra.mxu0 %v264
    %349 = vmatpush.msra.mxu0 %v258
    %350 = vmatpush.msra.mxu0 %v252
    %351 = vmatpush.msra.mxu0 %v246
    %352 = vmatpush.msra.mxu0 %v240
    %353 = vmatpush.msra.mxu0 %v234
    %354 = vmatpush.msra.mxu0 %v228
    %355 = vmatpush.msra.mxu0 %v222
    %356 = vmatpush.msra.mxu0 %v216
    %357 = vmatmul.f32.gmra.mxu0 %v113
    %v358 = vpop.f32.mrf.mxu0
    %v359 = vadd.f32 %v330, %v358
    %360 = vmatmul.f32.gmra.mxu0 %v115
    %v361 = vpop.f32.mrf.mxu0
    %v362 = vadd.f32 %v333, %v361
    %363 = vmatmul.f32.gmra.mxu0 %v117
    %v364 = vpop.f32.mrf.mxu0
    %v365 = vadd.f32 %v336, %v364
    %366 = vmatmul.f32.gmra.mxu0 %v119
    %v367 = vpop.f32.mrf.mxu0
    %v368 = vadd.f32 %v339, %v367
    %369 = vdwg.mxu0
    %370 = vmatpush.msra.mxu0 %v211
    %371 = vmatpush.msra.mxu0 %v205
    %372 = vmatpush.msra.mxu0 %v199
    %373 = vmatpush.msra.mxu0 %v193
    %374 = vmatpush.msra.mxu0 %v187
    %375 = vmatpush.msra.mxu0 %v181
    %376 = vmatpush.msra.mxu0 %v175
    %377 = vmatpush.msra.mxu0 %v169
    %378 = vmatpush.msra.mxu0 %v163
    %379 = vmatpush.msra.mxu0 %v157
    %380 = vmatpush.msra.mxu0 %v151
    %381 = vmatpush.msra.mxu0 %v145
    %382 = vmatpush.msra.mxu0 %v139
    %383 = vmatpush.msra.mxu0 %v133
    %384 = vmatpush.msra.mxu0 %v127
    %385 = vmatpush.msra.mxu0 %v121
    %386 = vmatmul.f32.gmra.mxu0 %v112
    %v387 = vpop.f32.mrf.mxu0
    %v388 = vadd.f32 0.0, %v387
    %389 = vmatmul.f32.gmra.mxu0 %v114
    %v390 = vpop.f32.mrf.mxu0
    %v391 = vadd.f32 0.0, %v390
    %392 = vmatmul.f32.gmra.mxu0 %v116
    %v393 = vpop.f32.mrf.mxu0
    %v394 = vadd.f32 0.0, %v393
    %395 = vmatmul.f32.gmra.mxu0 %v118
    %v396 = vpop.f32.mrf.mxu0
    %v397 = vadd.f32 0.0, %v396
    %398 = vdwg.mxu0
    %399 = vmatpush.msra.mxu0 %v307
    %400 = vmatpush.msra.mxu0 %v301
    %401 = vmatpush.msra.mxu0 %v295
    %402 = vmatpush.msra.mxu0 %v289
    %403 = vmatpush.msra.mxu0 %v283
    %404 = vmatpush.msra.mxu0 %v277
    %405 = vmatpush.msra.mxu0 %v271
    %406 = vmatpush.msra.mxu0 %v265
    %407 = vmatpush.msra.mxu0 %v259
    %408 = vmatpush.msra.mxu0 %v253
    %409 = vmatpush.msra.mxu0 %v247
    %410 = vmatpush.msra.mxu0 %v241
    %411 = vmatpush.msra.mxu0 %v235
    %412 = vmatpush.msra.mxu0 %v229
    %413 = vmatpush.msra.mxu0 %v223
    %414 = vmatpush.msra.mxu0 %v217
    %415 = vmatmul.f32.gmra.mxu0 %v113
    %v416 = vpop.f32.mrf.mxu0
    %v417 = vadd.f32 %v388, %v416
    %418 = vmatmul.f32.gmra.mxu0 %v115
    %v419 = vpop.f32.mrf.mxu0
    %v420 = vadd.f32 %v391, %v419
    %421 = vmatmul.f32.gmra.mxu0 %v117
    %v422 = vpop.f32.mrf.mxu0
    %v423 = vadd.f32 %v394, %v422
    %424 = vmatmul.f32.gmra.mxu0 %v119
    %v425 = vpop.f32.mrf.mxu0
    %v426 = vadd.f32 %v397, %v425
    %427 = vdwg.mxu0
    %428 = vmatpush.msra.mxu0 %v212
    %429 = vmatpush.msra.mxu0 %v206
    %430 = vmatpush.msra.mxu0 %v200
    %431 = vmatpush.msra.mxu0 %v194
    %432 = vmatpush.msra.mxu0 %v188
    %433 = vmatpush.msra.mxu0 %v182
    %434 = vmatpush.msra.mxu0 %v176
    %435 = vmatpush.msra.mxu0 %v170
    %436 = vmatpush.msra.mxu0 %v164
    %437 = vmatpush.msra.mxu0 %v158
    %438 = vmatpush.msra.mxu0 %v152
    %439 = vmatpush.msra.mxu0 %v146
    %440 = vmatpush.msra.mxu0 %v140
    %441 = vmatpush.msra.mxu0 %v134
    %442 = vmatpush.msra.mxu0 %v128
    %443 = vmatpush.msra.mxu0 %v122
    %444 = vmatmul.f32.gmra.mxu0 %v112
    %v445 = vpop.f32.mrf.mxu0
    %v446 = vadd.f32 0.0, %v445
    %447 = vmatmul.f32.gmra.mxu0 %v114
    %v448 = vpop.f32.mrf.mxu0
    %v449 = vadd.f32 0.0, %v448
    %450 = vmatmul.f32.gmra.mxu0 %v116
    %v451 = vpop.f32.mrf.mxu0
    %v452 = vadd.f32 0.0, %v451
    %453 = vmatmul.f32.gmra.mxu0 %v118
    %v454 = vpop.f32.mrf.mxu0
    %v455 = vadd.f32 0.0, %v454
    %456 = vdwg.mxu0
    %457 = vmatpush.msra.mxu0 %v308
    %458 = vmatpush.msra.mxu0 %v302
    %459 = vmatpush.msra.mxu0 %v296
    %460 = vmatpush.msra.mxu0 %v290
    %461 = vmatpush.msra.mxu0 %v284
    %462 = vmatpush.msra.mxu0 %v278
    %463 = vmatpush.msra.mxu0 %v272
    %464 = vmatpush.msra.mxu0 %v266
    %465 = vmatpush.msra.mxu0 %v260
    %466 = vmatpush.msra.mxu0 %v254
    %467 = vmatpush.msra.mxu0 %v248
    %468 = vmatpush.msra.mxu0 %v242
    %469 = vmatpush.msra.mxu0 %v236
    %470 = vmatpush.msra.mxu0 %v230
    %471 = vmatpush.msra.mxu0 %v224
    %472 = vmatpush.msra.mxu0 %v218
    %473 = vmatmul.f32.gmra.mxu0 %v113
    %v474 = vpop.f32.mrf.mxu0
    %v475 = vadd.f32 %v446, %v474
    %476 = vmatmul.f32.gmra.mxu0 %v115
    %v477 = vpop.f32.mrf.mxu0
    %v478 = vadd.f32 %v449, %v477
    %479 = vmatmul.f32.gmra.mxu0 %v117
    %v480 = vpop.f32.mrf.mxu0
    %v481 = vadd.f32 %v452, %v480
    %482 = vmatmul.f32.gmra.mxu0 %v119
    %v483 = vpop.f32.mrf.mxu0
    %v484 = vadd.f32 %v455, %v483
    %485 = vdwg.mxu0
    %486 = vmatpush.msra.mxu0 %v213
    %487 = vmatpush.msra.mxu0 %v207
    %488 = vmatpush.msra.mxu0 %v201
    %489 = vmatpush.msra.mxu0 %v195
    %490 = vmatpush.msra.mxu0 %v189
    %491 = vmatpush.msra.mxu0 %v183
    %492 = vmatpush.msra.mxu0 %v177
    %493 = vmatpush.msra.mxu0 %v171
    %494 = vmatpush.msra.mxu0 %v165
    %495 = vmatpush.msra.mxu0 %v159
    %496 = vmatpush.msra.mxu0 %v153
    %497 = vmatpush.msra.mxu0 %v147
    %498 = vmatpush.msra.mxu0 %v141
    %499 = vmatpush.msra.mxu0 %v135
    %500 = vmatpush.msra.mxu0 %v129
    %501 = vmatpush.msra.mxu0 %v123
    %502 = vmatmul.f32.gmra.mxu0 %v112
    %v503 = vpop.f32.mrf.mxu0
    %v504 = vadd.f32 0.0, %v503
    %505 = vmatmul.f32.gmra.mxu0 %v114
    %v506 = vpop.f32.mrf.mxu0
    %v507 = vadd.f32 0.0, %v506
    %508 = vmatmul.f32.gmra.mxu0 %v116
    %v509 = vpop.f32.mrf.mxu0
    %v510 = vadd.f32 0.0, %v509
    %511 = vmatmul.f32.gmra.mxu0 %v118
    %v512 = vpop.f32.mrf.mxu0
    %v513 = vadd.f32 0.0, %v512
    %514 = vdwg.mxu0
    %515 = vmatpush.msra.mxu0 %v309
    %516 = vmatpush.msra.mxu0 %v303
    %517 = vmatpush.msra.mxu0 %v297
    %518 = vmatpush.msra.mxu0 %v291
    %519 = vmatpush.msra.mxu0 %v285
    %520 = vmatpush.msra.mxu0 %v279
    %521 = vmatpush.msra.mxu0 %v273
    %522 = vmatpush.msra.mxu0 %v267
    %523 = vmatpush.msra.mxu0 %v261
    %524 = vmatpush.msra.mxu0 %v255
    %525 = vmatpush.msra.mxu0 %v249
    %526 = vmatpush.msra.mxu0 %v243
    %527 = vmatpush.msra.mxu0 %v237
    %528 = vmatpush.msra.mxu0 %v231
    %529 = vmatpush.msra.mxu0 %v225
    %530 = vmatpush.msra.mxu0 %v219
    %531 = vmatmul.f32.gmra.mxu0 %v113
    %v532 = vpop.f32.mrf.mxu0
    %v533 = vadd.f32 %v504, %v532
    %534 = vmatmul.f32.gmra.mxu0 %v115
    %v535 = vpop.f32.mrf.mxu0
    %v536 = vadd.f32 %v507, %v535
    %537 = vmatmul.f32.gmra.mxu0 %v117
    %v538 = vpop.f32.mrf.mxu0
    %v539 = vadd.f32 %v510, %v538
    %540 = vmatmul.f32.gmra.mxu0 %v119
    %v541 = vpop.f32.mrf.mxu0
    %v542 = vadd.f32 %v513, %v541
    %543 = vdwg.mxu0
    %544 = vmatpush.msra.mxu0 %v214
    %545 = vmatpush.msra.mxu0 %v208
    %546 = vmatpush.msra.mxu0 %v202
    %547 = vmatpush.msra.mxu0 %v196
    %548 = vmatpush.msra.mxu0 %v190
    %549 = vmatpush.msra.mxu0 %v184
    %550 = vmatpush.msra.mxu0 %v178
    %551 = vmatpush.msra.mxu0 %v172
    %552 = vmatpush.msra.mxu0 %v166
    %553 = vmatpush.msra.mxu0 %v160
    %554 = vmatpush.msra.mxu0 %v154
    %555 = vmatpush.msra.mxu0 %v148
    %556 = vmatpush.msra.mxu0 %v142
    %557 = vmatpush.msra.mxu0 %v136
    %558 = vmatpush.msra.mxu0 %v130
    %559 = vmatpush.msra.mxu0 %v124
    %560 = vmatmul.f32.gmra.mxu0 %v112
    %v561 = vpop.f32.mrf.mxu0
    %v562 = vadd.f32 0.0, %v561
    %563 = vmatmul.f32.gmra.mxu0 %v114
    %v564 = vpop.f32.mrf.mxu0
    %v565 = vadd.f32 0.0, %v564
    %566 = vmatmul.f32.gmra.mxu0 %v116
    %v567 = vpop.f32.mrf.mxu0
    %v568 = vadd.f32 0.0, %v567
    %569 = vmatmul.f32.gmra.mxu0 %v118
    %v570 = vpop.f32.mrf.mxu0
    %v571 = vadd.f32 0.0, %v570
    %572 = vdwg.mxu0
    %573 = vmatpush.msra.mxu0 %v310
    %574 = vmatpush.msra.mxu0 %v304
    %575 = vmatpush.msra.mxu0 %v298
    %576 = vmatpush.msra.mxu0 %v292
    %577 = vmatpush.msra.mxu0 %v286
    %578 = vmatpush.msra.mxu0 %v280
    %579 = vmatpush.msra.mxu0 %v274
    %580 = vmatpush.msra.mxu0 %v268
    %581 = vmatpush.msra.mxu0 %v262
    %582 = vmatpush.msra.mxu0 %v256
    %583 = vmatpush.msra.mxu0 %v250
    %584 = vmatpush.msra.mxu0 %v244
    %585 = vmatpush.msra.mxu0 %v238
    %586 = vmatpush.msra.mxu0 %v232
    %587 = vmatpush.msra.mxu0 %v226
    %588 = vmatpush.msra.mxu0 %v220
    %589 = vmatmul.f32.gmra.mxu0 %v113
    %v590 = vpop.f32.mrf.mxu0
    %v591 = vadd.f32 %v562, %v590
    %592 = vmatmul.f32.gmra.mxu0 %v115
    %v593 = vpop.f32.mrf.mxu0
    %v594 = vadd.f32 %v565, %v593
    %595 = vmatmul.f32.gmra.mxu0 %v117
    %v596 = vpop.f32.mrf.mxu0
    %v597 = vadd.f32 %v568, %v596
    %598 = vmatmul.f32.gmra.mxu0 %v119
    %v599 = vpop.f32.mrf.mxu0
    %v600 = vadd.f32 %v571, %v599
    %601 = vdwg.mxu0
    %602 = vmatpush.msra.mxu0 %v215
    %603 = vmatpush.msra.mxu0 %v209
    %604 = vmatpush.msra.mxu0 %v203
    %605 = vmatpush.msra.mxu0 %v197
    %606 = vmatpush.msra.mxu0 %v191
    %607 = vmatpush.msra.mxu0 %v185
    %608 = vmatpush.msra.mxu0 %v179
    %609 = vmatpush.msra.mxu0 %v173
    %610 = vmatpush.msra.mxu0 %v167
    %611 = vmatpush.msra.mxu0 %v161
    %612 = vmatpush.msra.mxu0 %v155
    %613 = vmatpush.msra.mxu0 %v149
    %614 = vmatpush.msra.mxu0 %v143
    %615 = vmatpush.msra.mxu0 %v137
    %616 = vmatpush.msra.mxu0 %v131
    %617 = vmatpush.msra.mxu0 %v125
    %618 = vmatmul.f32.gmra.mxu0 %v112
    %v619 = vpop.f32.mrf.mxu0
    %v620 = vadd.f32 0.0, %v619
    %621 = vmatmul.f32.gmra.mxu0 %v114
    %v622 = vpop.f32.mrf.mxu0
    %v623 = vadd.f32 0.0, %v622
    %624 = vmatmul.f32.gmra.mxu0 %v116
    %v625 = vpop.f32.mrf.mxu0
    %v626 = vadd.f32 0.0, %v625
    %627 = vmatmul.f32.gmra.mxu0 %v118
    %v628 = vpop.f32.mrf.mxu0
    %v629 = vadd.f32 0.0, %v628
    %630 = vdwg.mxu0
    %631 = vmatpush.msra.mxu0 %v311
    %632 = vmatpush.msra.mxu0 %v305
    %633 = vmatpush.msra.mxu0 %v299
    %634 = vmatpush.msra.mxu0 %v293
    %635 = vmatpush.msra.mxu0 %v287
    %636 = vmatpush.msra.mxu0 %v281
    %637 = vmatpush.msra.mxu0 %v275
    %638 = vmatpush.msra.mxu0 %v269
    %639 = vmatpush.msra.mxu0 %v263
    %640 = vmatpush.msra.mxu0 %v257
    %641 = vmatpush.msra.mxu0 %v251
    %642 = vmatpush.msra.mxu0 %v245
    %643 = vmatpush.msra.mxu0 %v239
    %644 = vmatpush.msra.mxu0 %v233
    %645 = vmatpush.msra.mxu0 %v227
    %646 = vmatpush.msra.mxu0 %v221
    %647 = vmatmul.f32.gmra.mxu0 %v113
    %v648 = vpop.f32.mrf.mxu0
    %v649 = vadd.f32 %v620, %v648
    %650 = vmatmul.f32.gmra.mxu0 %v115
    %v651 = vpop.f32.mrf.mxu0
    %v652 = vadd.f32 %v623, %v651
    %653 = vmatmul.f32.gmra.mxu0 %v117
    %v654 = vpop.f32.mrf.mxu0
    %v655 = vadd.f32 %v626, %v654
    %656 = vmatmul.f32.gmra.mxu0 %v119
    %v657 = vpop.f32.mrf.mxu0
    %v658 = vadd.f32 %v629, %v657
    %659 = vdwg.mxu0
    %v660 = vadd.f32 %v88, %v359
    %v661 = vadd.f32 %v89, %v417
    %v662 = vadd.f32 %v90, %v475
    %v663 = vadd.f32 %v91, %v533
    %v664 = vadd.f32 %v92, %v591
    %v665 = vadd.f32 %v93, %v649
    %v666 = vadd.f32 %v94, %v362
    %v667 = vadd.f32 %v95, %v420
    %v668 = vadd.f32 %v96, %v478
    %v669 = vadd.f32 %v97, %v536
    %v670 = vadd.f32 %v98, %v594
    %v671 = vadd.f32 %v99, %v652
    %v672 = vadd.f32 %v100, %v365
    %v673 = vadd.f32 %v101, %v423
    %v674 = vadd.f32 %v102, %v481
    %v675 = vadd.f32 %v103, %v539
    %v676 = vadd.f32 %v104, %v597
    %v677 = vadd.f32 %v105, %v655
    %v678 = vadd.f32 %v106, %v368
    %v679 = vadd.f32 %v107, %v426
    %v680 = vadd.f32 %v108, %v484
    %v681 = vadd.f32 %v109, %v542
    %v682 = vadd.f32 %v110, %v600
    %v683 = vadd.f32 %v111, %v658
    %684 = vst [vmem:[#allocation2] sm:$0xff] %v660
    %685 = vst [vmem:[#allocation2 + $0x8] sm:$0xff] %v661
    %686 = vst [vmem:[#allocation2 + $0x10] sm:$0xff] %v662
    %687 = vst [vmem:[#allocation2 + $0x18] sm:$0xff] %v663
    %688 = vst [vmem:[#allocation2 + $0x20] sm:$0xff] %v664
    %689 = vst [vmem:[#allocation2 + $0x28] sm:$0xff] %v665
    %690 = vst [vmem:[#allocation2 + $0x30] sm:$0xff] %v666
    %691 = vst [vmem:[#allocation2 + $0x38] sm:$0xff] %v667
    %692 = vst [vmem:[#allocation2 + $0x40] sm:$0xff] %v668
    %693 = vst [vmem:[#allocation2 + $0x48] sm:$0xff] %v669
    %694 = vst [vmem:[#allocation2 + $0x50] sm:$0xff] %v670
    %695 = vst [vmem:[#allocation2 + $0x58] sm:$0xff] %v671
    %696 = vst [vmem:[#allocation2 + $0x60] sm:$0xff] %v672
    %697 = vst [vmem:[#allocation2 + $0x68] sm:$0xff] %v673
    %698 = vst [vmem:[#allocation2 + $0x70] sm:$0xff] %v674
    %699 = vst [vmem:[#allocation2 + $0x78] sm:$0xff] %v675
    %700 = vst [vmem:[#allocation2 + $0x80] sm:$0xff] %v676
    %701 = vst [vmem:[#allocation2 + $0x88] sm:$0xff] %v677
    %702 = vst [vmem:[#allocation2 + $0x90] sm:$0xff] %v678
    %703 = vst [vmem:[#allocation2 + $0x98] sm:$0xff] %v679
    %704 = vst [vmem:[#allocation2 + $0xa0] sm:$0xff] %v680
    %705 = vst [vmem:[#allocation2 + $0xa8] sm:$0xff] %v681
    %706 = vst [vmem:[#allocation2 + $0xb0] sm:$0xff] %v682
    %707 = vst [vmem:[#allocation2 + $0xb8] sm:$0xff] %v683
    // Predicated region
    $region30: #{tpu_custom_call.1} parent=1 // pred_check
      %p708 = pneg %p60
    $region31: #{tpu_custom_call.1} parent=1 // pred_check_branch
      %710 = sbr.rel (%p708) target = $region33
    $region32: #{tpu_custom_call.1} parent=1 // pred_region
      %v711 = vld [vmem:[#allocation2] sm:$0xff]
      %v712 = vld [vmem:[#allocation2 + $0x8] sm:$0xff]
      %v713 = vld [vmem:[#allocation2 + $0x10] sm:$0xff]
      %v714 = vld [vmem:[#allocation2 + $0x18] sm:$0xff]
      %v715 = vld [vmem:[#allocation2 + $0x20] sm:$0xff]
      %v716 = vld [vmem:[#allocation2 + $0x28] sm:$0xff]
      %v717 = vld [vmem:[#allocation2 + $0x30] sm:$0xff]
      %v718 = vld [vmem:[#allocation2 + $0x38] sm:$0xff]
      %v719 = vld [vmem:[#allocation2 + $0x40] sm:$0xff]
      %v720 = vld [vmem:[#allocation2 + $0x48] sm:$0xff]
      %v721 = vld [vmem:[#allocation2 + $0x50] sm:$0xff]
      %v722 = vld [vmem:[#allocation2 + $0x58] sm:$0xff]
      %v723 = vld [vmem:[#allocation2 + $0x60] sm:$0xff]
      %v724 = vld [vmem:[#allocation2 + $0x68] sm:$0xff]
      %v725 = vld [vmem:[#allocation2 + $0x70] sm:$0xff]
      %v726 = vld [vmem:[#allocation2 + $0x78] sm:$0xff]
      %v727 = vld [vmem:[#allocation2 + $0x80] sm:$0xff]
      %v728 = vld [vmem:[#allocation2 + $0x88] sm:$0xff]
      %v729 = vld [vmem:[#allocation2 + $0x90] sm:$0xff]
      %v730 = vld [vmem:[#allocation2 + $0x98] sm:$0xff]
      %v731 = vld [vmem:[#allocation2 + $0xa0] sm:$0xff]
      %v732 = vld [vmem:[#allocation2 + $0xa8] sm:$0xff]
      %v733 = vld [vmem:[#allocation2 + $0xb0] sm:$0xff]
      %v734 = vld [vmem:[#allocation2 + $0xb8] sm:$0xff]
      %v735 = vld [vmem:[#allocation8] sm:$0x3f]
      %v737 = vperm.slane %v735, 0
      %v738 = vperm.slane %v735, 1
      %v739 = vperm.slane %v735, 2
      %v740 = vperm.slane %v735, 3
      %v741 = vperm.slane %v735, 4
      %v742 = vperm.slane %v735, 5
      %v749 = vadd.f32 %v711, %v737
      %v750 = vadd.f32 %v712, %v738
      %v751 = vadd.f32 %v713, %v739
      %v752 = vadd.f32 %v714, %v740
      %v753 = vadd.f32 %v715, %v741
      %v754 = vadd.f32 %v716, %v742
      %v755 = vadd.f32 %v717, %v737
      %v756 = vadd.f32 %v718, %v738
      %v757 = vadd.f32 %v719, %v739
      %v758 = vadd.f32 %v720, %v740
      %v759 = vadd.f32 %v721, %v741
      %v760 = vadd.f32 %v722, %v742
      %v761 = vadd.f32 %v723, %v737
      %v762 = vadd.f32 %v724, %v738
      %v763 = vadd.f32 %v725, %v739
      %v764 = vadd.f32 %v726, %v740
      %v765 = vadd.f32 %v727, %v741
      %v766 = vadd.f32 %v728, %v742
      %v767 = vadd.f32 %v729, %v737
      %v768 = vadd.f32 %v730, %v738
      %v769 = vadd.f32 %v731, %v739
      %v770 = vadd.f32 %v732, %v740
      %v771 = vadd.f32 %v733, %v741
      %v772 = vadd.f32 %v734, %v742
      %773 = vst [vmem:[#allocation9] sm:$0xff] %v749
      %774 = vst [vmem:[#allocation9 + $0x8] sm:$0xff] %v750
      %775 = vst [vmem:[#allocation9 + $0x10] sm:$0xff] %v751
      %776 = vst [vmem:[#allocation9 + $0x18] sm:$0xff] %v752
      %777 = vst [vmem:[#allocation9 + $0x20] sm:$0xff] %v753
      %778 = vst [vmem:[#allocation9 + $0x28] sm:$0xff] %v754
      %779 = vst [vmem:[#allocation9 + $0x30] sm:$0xff] %v755
      %780 = vst [vmem:[#allocation9 + $0x38] sm:$0xff] %v756
      %781 = vst [vmem:[#allocation9 + $0x40] sm:$0xff] %v757
      %782 = vst [vmem:[#allocation9 + $0x48] sm:$0xff] %v758
      %783 = vst [vmem:[#allocation9 + $0x50] sm:$0xff] %v759
      %784 = vst [vmem:[#allocation9 + $0x58] sm:$0xff] %v760
      %785 = vst [vmem:[#allocation9 + $0x60] sm:$0xff] %v761
      %786 = vst [vmem:[#allocation9 + $0x68] sm:$0xff] %v762
      %787 = vst [vmem:[#allocation9 + $0x70] sm:$0xff] %v763
      %788 = vst [vmem:[#allocation9 + $0x78] sm:$0xff] %v764
      %789 = vst [vmem:[#allocation9 + $0x80] sm:$0xff] %v765
      %790 = vst [vmem:[#allocation9 + $0x88] sm:$0xff] %v766
      %791 = vst [vmem:[#allocation9 + $0x90] sm:$0xff] %v767
      %792 = vst [vmem:[#allocation9 + $0x98] sm:$0xff] %v768
      %793 = vst [vmem:[#allocation9 + $0xa0] sm:$0xff] %v769
      %794 = vst [vmem:[#allocation9 + $0xa8] sm:$0xff] %v770
      %795 = vst [vmem:[#allocation9 + $0xb0] sm:$0xff] %v771
      %796 = vst [vmem:[#allocation9 + $0xb8] sm:$0xff] %v772
    $region33: #{tpu_custom_call.1} parent=1 // pred_fallthru
      _
    // Predicated region
    $region34: #{tpu_custom_call.1} parent=1 // pred_check
      _
    $region35: #{tpu_custom_call.1} parent=1 // pred_check_branch
      %798 = sbr.rel (0) target = $region37
    $region36: #{tpu_custom_call.1} parent=1 // pred_region
      %800 = vsyncadd [#allocation5], 0
      %s801 = sshll.u32 [#allocation9], 4
      %s802 = int_to_ptr.vmem [resolvable:$true] %s801
      %s803 = sshll.u32 %s3, 4
      %s804 = int_to_ptr.hbm [resolvable:$true] %s803
      %809 = dma.vmem_to_hbm [thread:$0]  %s802, 3072, %s804, [#allocation5], 768, 768, 48
    $region37: #{tpu_custom_call.1} parent=1 // pred_fallthru
      _
    // Predicated region
    $region38: #{tpu_custom_call.1} parent=1 // pred_check
      _
    $region39: #{tpu_custom_call.1} parent=1 // pred_check_branch
      %811 = sbr.rel (0) target = $region41
    $region40: #{tpu_custom_call.1} parent=1 // pred_region
      %813 = dma.done [#allocation5], 3072
    $region41: #{tpu_custom_call.1} parent=1 // pred_fallthru
      _
    %814 = vsyncpa [#allocation4], 1
    %815 = vsyncpa [#allocation7], 1
    %816 = vsyncpa [#allocation5], 1

</llo_original>
